<compile_context>
chip_gen: v7x
topology: tpu7x:2x2x1
jax: 0.10.0
libtpu: 0.0.40
codegen_flags: <defaults>
</compile_context>

<pallas_src>
import functools
import math

import jax
import jax.numpy as jnp
from jax import lax
from jax.experimental import pallas as pl
from jax.experimental.pallas import tpu as pltpu


def _pad8(c):
    return ((c + 7) // 8) * 8


# ---------------------------------------------------------------------------
# pltpu.roll direction probe (review correctness concern)
# ---------------------------------------------------------------------------
_ROLL_SIGN = None  # +1 if pltpu.roll matches jnp.roll, -1 if mirrored


def _detect_roll_sign():
    global _ROLL_SIGN
    if _ROLL_SIGN is None:
        probe = jnp.arange(8 * 128, dtype=jnp.float32).reshape(8, 128)

        def k(x_ref, o_ref):
            o_ref[...] = pltpu.roll(x_ref[...], 1, axis=1)

        out = pl.pallas_call(
            k, out_shape=jax.ShapeDtypeStruct((8, 128), jnp.float32))(probe)
        _ROLL_SIGN = 1 if bool(
            jnp.allclose(out, jnp.roll(probe, 1, axis=1))) else -1
    return _ROLL_SIGN


# ---------------------------------------------------------------------------
# In-kernel helpers
# ---------------------------------------------------------------------------
def _lane_roll(x, amount, length):
    """result[:, m] = x[:, (m - amount) % length]   (jnp.roll convention)."""
    amount = amount % length
    if amount == 0:
        return x
    if length % 128 == 0:
        sign = _ROLL_SIGN if _ROLL_SIGN is not None else 1
        shift = amount if sign == 1 else (length - amount)
        return pltpu.roll(x, shift, axis=1)
    # tiny non-128-multiple lane axis (the 8x8 decoder map): exact roll via slices
    k = length - amount
    return jnp.concatenate([x[:, k:], x[:, :k]], axis=1)


def _elu(v):
    return jnp.where(v > 0, v, jnp.exp(jnp.minimum(v, 0.0)) - 1.0)


def _apply_act(v, act):
    if act == "elu":
        return _elu(v)
    if act == "tanh":
        return jnp.tanh(v)
    return v


# ---------------------------------------------------------------------------
# The fused kernel (one image per grid step)
# ---------------------------------------------------------------------------
def _began_d_kernel(*refs, plan, H0, W0):
    x_ref, o_ref = refs[0], refs[-1]
    wrefs = refs[1:-1]

    mask_cache = {}

    def masks(H, W):
        key = (H, W)
        if key not in mask_cache:
            M = H * W
            pos = lax.broadcasted_iota(jnp.int32, (1, M), 1)
            col = jnp.bitwise_and(pos, W - 1)
            row = jnp.right_shift(pos, int(math.log2(W)))
            mask_cache[key] = (col >= 1, col <= W - 2, row >= 1, row <= H - 2)
        return mask_cache[key]

    def pool_matrix(W, G):
        # (2*G*W, G*W/2) block matrix: 2x2 mean of G row-pairs in one matmul.
        W2 = W // 2
        rows, cols = 2 * G * W, G * W2
        j = lax.broadcasted_iota(jnp.int32, (rows, cols), 0)
        q = lax.broadcasted_iota(jnp.int32, (rows, cols), 1)
        pair_ok = (jnp.right_shift(j, int(math.log2(2 * W))) ==
                   jnp.right_shift(q, int(math.log2(W2))))
        col_ok = (jnp.right_shift(jnp.bitwise_and(j, W - 1), 1) ==
                  jnp.bitwise_and(q, W2 - 1))
        return jnp.where(jnp.logical_and(pair_ok, col_ok), 0.25,
                         0.0).astype(jnp.float32)

    def up_matrix(W, G):
        # (G*W, 4*G*W) block matrix: 2x nearest replication of G rows.
        rows, cols = G * W, 4 * G * W
        j = lax.broadcasted_iota(jnp.int32, (rows, cols), 0)
        q = lax.broadcasted_iota(jnp.int32, (rows, cols), 1)
        row_ok = (jnp.right_shift(q, int(math.log2(4 * W))) ==
                  jnp.right_shift(j, int(math.log2(W))))
        col_ok = (jnp.right_shift(jnp.bitwise_and(q, 2 * W - 1), 1) ==
                  jnp.bitwise_and(j, W - 1))
        return jnp.where(jnp.logical_and(row_ok, col_ok), 1.0,
                         0.0).astype(jnp.float32)

    def conv3x3(x, w_ref, b_ref, act, H, W):
        # "same" 3x3 conv as ONE matmul: (Cout, 9Cin) @ (9Cin, H*W).
        M = x.shape[1]
        col_ge1, col_le, row_ge1, row_le = masks(H, W)
        x_l = jnp.where(col_ge1, _lane_roll(x, 1, M), 0.0)    # neighbor col-1
        x_r = jnp.where(col_le, _lane_roll(x, -1, M), 0.0)    # neighbor col+1
        xc = jnp.concatenate([x_l, x, x_r], axis=0)           # (3Cin, M)
        x_u = jnp.where(row_ge1, _lane_roll(xc, W, M), 0.0)   # row-1
        x_d = jnp.where(row_le, _lane_roll(xc, -W, M), 0.0)   # row+1
        stacked = jnp.concatenate([x_u, xc, x_d], axis=0)     # (9Cin, M)
        acc = jnp.dot(w_ref[...], stacked.astype(jnp.bfloat16),
                      preferred_element_type=jnp.float32)
        return _apply_act(acc + b_ref[...], act)

    def conv1x1(x, w_ref, b_ref, act):
        acc = jnp.dot(w_ref[...], x.astype(jnp.bfloat16),
                      preferred_element_type=jnp.float32)
        return _apply_act(acc + b_ref[...], act)

    def avg_pool2x2(x, H, W):
        H2, W2 = H // 2, W // 2
        G = min(H2, max(1, 512 // W))                 # row-pairs per matmul
        B = pool_matrix(W, G)
        pieces = []
        for g in range(H2 // G):
            sl = x[:, g * 2 * G * W:(g + 1) * 2 * G * W]
            pieces.append(jnp.dot(sl, B, preferred_element_type=jnp.float32))
        y = pieces[0] if len(pieces) == 1 else jnp.concatenate(pieces, axis=1)
        return y, H2, W2

    def upsample2x(x, H, W):
        G = min(H, max(1, 256 // W))                  # input rows per matmul
        E = up_matrix(W, G)
        pieces = []
        for g in range(H // G):
            sl = x[:, g * G * W:(g + 1) * G * W]
            pieces.append(jnp.dot(sl, E, preferred_element_type=jnp.float32))
        y = pieces[0] if len(pieces) == 1 else jnp.concatenate(pieces, axis=1)
        return y, 2 * H, 2 * W

    def encode_dense(x, w_ref, b_ref):
        # Conv2d(C, hidden, k=8, valid) on the 8x8 map == dense over (C, 64).
        C, M = x.shape
        wv = w_ref[...]                               # (C*M, hidden) f32
        h = None
        for c in range(C):
            t = jnp.dot(x[c:c + 1, :], wv[c * M:(c + 1) * M, :],
                        preferred_element_type=jnp.float32)
            h = t if h is None else h + t
        return h + b_ref[...]                         # (1, hidden)

    def decode_dense(h, w_ref, b_ref):
        # ConvTranspose2d(hidden, ngf, k=8) on a 1x1 input -> (ngf, 8*8).
        hidden = h.shape[1]
        wv = w_ref[...]                               # (ngf*hidden, 64) f32
        ngf = wv.shape[0] // hidden
        ngf_p = b_ref.shape[0]
        g_iota = lax.broadcasted_iota(jnp.int32, (ngf_p, 64), 0)
        y = jnp.zeros((ngf_p, 64), jnp.float32)
        for g in range(ngf):
            rowv = jnp.dot(h, wv[g * hidden:(g + 1) * hidden, :],
                           preferred_element_type=jnp.float32)   # (1, 64)
            y = y + jnp.where(g_iota == g, rowv, 0.0)
        return y + b_ref[...]

    H, W = H0, W0
    x = x_ref[0].astype(jnp.float32)                  # (Cp, H*W)

    wi = 0
    for kind, act in plan:
        if kind == "c3":
            x = conv3x3(x, wrefs[wi], wrefs[wi + 1], act, H, W)
            wi += 2
        elif kind == "c1":
            x = conv1x1(x, wrefs[wi], wrefs[wi + 1], act)
            wi += 2
        elif kind == "pool":
            x, H, W = avg_pool2x2(x, H, W)
        elif kind == "up":
            x, H, W = upsample2x(x, H, W)
        elif kind == "enc":
            x = encode_dense(x, wrefs[wi], wrefs[wi + 1])
            wi += 2
            H = W = 1
        elif kind == "dec":
            x = decode_dense(x, wrefs[wi], wrefs[wi + 1])
            wi += 2
            H = W = 8
        else:
            raise ValueError(kind)

    o_ref[0] = x.astype(o_ref.dtype)


# ---------------------------------------------------------------------------
# Wrapper
# ---------------------------------------------------------------------------
def d_forward(plan, weights, x_nchw):
    N, nc, H, W = x_nchw.shape
    assert H == 128 and W == 128, "BEGAN D needs 128x128 inputs (4 pools -> 8x8)"
    ncp = _pad8(nc)
    M = H * W
    x = jnp.pad(x_nchw.astype(jnp.float32),
                ((0, 0), (0, ncp - nc), (0, 0), (0, 0))).reshape(N, ncp, M)

    cout_p = weights[-1].shape[0]                      # padded out channels
    in_specs = [pl.BlockSpec((1, ncp, M), lambda n: (n, 0, 0))]
    for warr in weights:
        in_specs.append(pl.BlockSpec(warr.shape, lambda n: (0, 0)))

    kernel = functools.partial(_began_d_kernel, plan=plan, H0=H, W0=W)
    y = pl.pallas_call(
        kernel,
        out_shape=jax.ShapeDtypeStruct((N, cout_p, M), jnp.float32),
        grid=(N,),
        in_specs=in_specs,
        out_specs=pl.BlockSpec((1, cout_p, M), lambda n: (n, 0, 0)),
        compiler_params=pltpu.CompilerParams(
            dimension_semantics=("parallel",),
            vmem_limit_bytes=32 * 1024 * 1024),
    )(x, *weights)
    return y[:, :nc, :].reshape(N, nc, H, W)


# ---------------------------------------------------------------------------
# Parameters (PyTorch layouts) and one-time prepacking to kernel layouts
# ---------------------------------------------------------------------------
def _conv_params(key, cin, cout, k):
    k1, k2 = jax.random.split(key)
    fan_in = cin * k * k
    w = jax.random.normal(k1, (cout, cin, k, k), jnp.float32) / jnp.sqrt(fan_in)
    b = 0.01 * jax.random.normal(k2, (cout,), jnp.float32)
    return w, b


def _deconv_params(key, cin, cout, k):
    k1, k2 = jax.random.split(key)
    w = jax.random.normal(k1, (cin, cout, k, k), jnp.float32) / jnp.sqrt(cin)
    b = 0.01 * jax.random.normal(k2, (cout,), jnp.float32)
    return w, b


def init_params(key, nc, ndf, ngf, hidden_size):
    keys = iter(jax.random.split(key, 64))
    p = {"e_conv1": _conv_params(next(keys), nc, ndf, 3)}
    enc_dims = [(ndf, ndf), (ndf, 2 * ndf), (2 * ndf, 3 * ndf), (3 * ndf, 4 * ndf)]
    for name, (ci, co) in zip(["e_conv2", "e_conv3", "e_conv4", "e_conv5"], enc_dims):
        p[name] = {"c1": _conv_params(next(keys), ci, ci, 3),
                   "c2": _conv_params(next(keys), ci, ci, 3),
                   "c3": _conv_params(next(keys), ci, co, 1)}
    p["encode"] = _conv_params(next(keys), 4 * ndf, hidden_size, 8)
    p["decode"] = _deconv_params(next(keys), hidden_size, ngf, 8)
    for name in ["dconv6", "dconv5", "dconv4", "dconv3"]:
        p[name] = {"c1": _conv_params(next(keys), ngf, ngf, 3),
                   "c2": _conv_params(next(keys), ngf, ngf, 3)}
    p["dconv1"] = {"c1": _conv_params(next(keys), ngf, ngf, 3),
                   "c2": _conv_params(next(keys), ngf, ngf, 3),
                   "c3": _conv_params(next(keys), ngf, nc, 3)}
    return p


def prepack_params(p, nc, ndf, ngf, hidden):
    plan, weights = [], []

    def add(kind, act, *arrs):
        plan.append((kind, act))
        weights.extend(arrs)

    def pack_c3(wb, cin, cout):
        w, b = wb
        cin_p, cout_p = _pad8(cin), _pad8(cout)
        wp = jnp.zeros((cout_p, cin_p, 3, 3), jnp.float32).at[:cout, :cin].set(w)
        # column index = (ky*3 + kx)*Cin_p + ci  (matches in-kernel stacking)
        wf = jnp.transpose(wp, (0, 2, 3, 1)).reshape(cout_p, 9 * cin_p)
        bp = jnp.zeros((cout_p, 1), jnp.float32).at[:cout, 0].set(b)
        return wf.astype(jnp.bfloat16), bp

    def pack_c1(wb, cin, cout):
        w, b = wb
        cin_p, cout_p = _pad8(cin), _pad8(cout)
        wp = jnp.zeros((cout_p, cin_p), jnp.float32).at[:cout, :cin].set(w[:, :, 0, 0])
        bp = jnp.zeros((cout_p, 1), jnp.float32).at[:cout, 0].set(b)
        return wp.astype(jnp.bfloat16), bp

    # ---- Encoder ----
    add("c3", "elu", *pack_c3(p["e_conv1"], nc, ndf))
    enc_dims = [(ndf, ndf), (ndf, 2 * ndf), (2 * ndf, 3 * ndf), (3 * ndf, 4 * ndf)]
    for name, (ci, co) in zip(["e_conv2", "e_conv3", "e_conv4", "e_conv5"], enc_dims):
        blk = p[name]
        add("c3", "elu", *pack_c3(blk["c1"], ci, ci))
        add("c3", "elu", *pack_c3(blk["c2"], ci, ci))
        add("c1", "none", *pack_c1(blk["c3"], ci, co))
        add("pool", "none")
    we, be = p["encode"]
    cenc_p = _pad8(4 * ndf)
    wep = jnp.zeros((hidden, cenc_p, 8, 8), jnp.float32).at[:, :4 * ndf].set(we)
    wef = jnp.transpose(wep.reshape(hidden, cenc_p, 64),
                        (1, 2, 0)).reshape(cenc_p * 64, hidden)
    add("enc", "none", wef.astype(jnp.float32),
        be.reshape(1, hidden).astype(jnp.float32))

    # ---- Decoder ----
    wd, bd = p["decode"]                               # (hidden, ngf, 8, 8)
    ngf_p = _pad8(ngf)
    wdf = jnp.transpose(wd.reshape(hidden, ngf, 64),
                        (1, 0, 2)).reshape(ngf * hidden, 64)
    bdp = jnp.zeros((ngf_p, 1), jnp.float32).at[:ngf, 0].set(bd)
    add("dec", "none", wdf.astype(jnp.float32), bdp)

    for name in ["dconv6", "dconv5", "dconv4", "dconv3"]:
        blk = p[name]
        add("c3", "elu", *pack_c3(blk["c1"], ngf, ngf))
        add("c3", "elu", *pack_c3(blk["c2"], ngf, ngf))
        add("up", "none")
    blk = p["dconv1"]
    add("c3", "elu", *pack_c3(blk["c1"], ngf, ngf))
    add("c3", "elu", *pack_c3(blk["c2"], ngf, ngf))
    add("c3", "tanh", *pack_c3(blk["c3"], ngf, nc))

    return tuple(plan), weights


# ---------------------------------------------------------------------------
# Pure-JAX reference (PyTorch semantics) for the tolerance check
# ---------------------------------------------------------------------------
def d_forward_ref(params, x):
    def conv(v, wb, pad):
        w, b = wb
        y = lax.conv_general_dilated(v, w, (1, 1), [(pad, pad), (pad, pad)],
                                     dimension_numbers=("NCHW", "OIHW", "NCHW"))
        return y + b[None, :, None, None]

    def elu(v):
        return jnp.where(v > 0, v, jnp.exp(jnp.minimum(v, 0.0)) - 1.0)

    def pool(v):
        n, c, h, w = v.shape
        return v.reshape(n, c, h // 2, 2, w // 2, 2).mean(axis=(3, 5))

    def up2(v):
        n, c, h, w = v.shape
        return jnp.broadcast_to(v[:, :, :, None, :, None],
                                (n, c, h, 2, w, 2)).reshape(n, c, 2 * h, 2 * w)

    v = elu(conv(x, params["e_conv1"], 1))
    for name in ["e_conv2", "e_conv3", "e_conv4", "e_conv5"]:
        blk = params[name]
        v = elu(conv(v, blk["c1"], 1))
        v = elu(conv(v, blk["c2"], 1))
        v = pool(conv(v, blk["c3"], 0))
    we, be = params["encode"]
    h = lax.conv_general_dilated(v, we, (1, 1), [(0, 0), (0, 0)],
                                 dimension_numbers=("NCHW", "OIHW", "NCHW"))
    h = h + be[None, :, None, None]

    wd, bd = params["decode"]
    y = jnp.einsum("nj,jghw->nghw", h[:, :, 0, 0], wd) + bd[None, :, None, None]
    for name in ["dconv6", "dconv5", "dconv4", "dconv3"]:
        blk = params[name]
        y = elu(conv(y, blk["c1"], 1))
        y = elu(conv(y, blk["c2"], 1))
        y = up2(y)
    blk = params["dconv1"]
    y = elu(conv(y, blk["c1"], 1))
    y = elu(conv(y, blk["c2"], 1))
    return jnp.tanh(conv(y, blk["c3"], 1))


# ---------------------------------------------------------------------------
if __name__ == "__main__":
    # Small channel counts; spatial size 128 is forced by the architecture
    # (four 2x pools must reach the encoder's 8x8 valid conv).
    nc, ndf, ngf, hidden_size = 3, 4, 4, 8
    batch, spatial = 2, 128

    key = jax.random.PRNGKey(0)
    kx, kp = jax.random.split(key)
    x = jax.random.normal(kx, (batch, nc, spatial, spatial), jnp.float32)
    params = init_params(kp, nc, ndf, ngf, hidden_size)
    plan, weights = prepack_params(params, nc, ndf, ngf, hidden_size)

    _detect_roll_sign()                       # resolve pltpu.roll convention

    fwd = jax.jit(functools.partial(d_forward, plan))
    out = jax.block_until_ready(fwd(weights, x))

    assert out.shape == (batch, nc, spatial, spatial), out.shape
    assert out.dtype == jnp.float32
    assert bool(jnp.all(jnp.isfinite(out)))
    assert bool(jnp.max(jnp.abs(out)) <= 1.0 + 1e-3)   # final Tanh range

    ref = jax.block_until_ready(jax.jit(d_forward_ref)(params, x))
    rel = float(jnp.max(jnp.abs(out - ref)) /
                jnp.maximum(jnp.max(jnp.abs(ref)), 1e-6))
    assert rel < 0.2, f"kernel vs reference mismatch: rel_inf={rel:.4f}"

    print("KERNEL_OK")
</pallas_src>

<mosaic_0001>
module attributes {stable_mosaic.version = 11 : i64} {
  func.func @k(%arg0: memref<8x128xf32, #tpu.memory_space<vmem>>, %arg1: memref<8x128xf32, #tpu.memory_space<vmem>>) attributes {dimension_semantics = [], scalar_prefetch = 0 : i64, scratch_operands = 0 : i64, tpu.core_type = #tpu.core_type<tc>} {
    %c0 = arith.constant 0 : index
    %c0_0 = arith.constant 0 : index
    %0 = vector.load %arg0[%c0, %c0_0] : memref<8x128xf32, #tpu.memory_space<vmem>>, vector<8x128xf32>
    %c1_i32 = arith.constant 1 : i32
    %1 = tpu.dynamic_rotate %0 by %c1_i32 dim 1 : vector<8x128xf32>, i32 -> vector<8x128xf32>
    %c0_1 = arith.constant 0 : index
    %c0_2 = arith.constant 0 : index
    %2 = vector.load %arg1[%c0_1, %c0_2] : memref<8x128xf32, #tpu.memory_space<vmem>>, vector<8x128xf32>
    tpu.vector_store %arg1[%c0_1, %c0_2], %1 {strides = array<i32>} : memref<8x128xf32, #tpu.memory_space<vmem>>, vector<8x128xf32>,
    return
  }
}

</mosaic_0001>

<llo_original>
// kernel: tpu_custom_call.1
$region0: #{tpu_custom_call.1}
  #allocation0 [shape = 'u32[]', space=smem, size = 0x4, offset = 0x4, fixed_abs, tag = 'smem constant byte address 0x4 - core index']
  #allocation1 [shape = 'u32[144,128]{1,0:T(1,128)}', space=vmem, size = 0x12000, scoped, tag = 'internal scratch']
  %s0 = inlined_call_operand.hbm [shape: f32[8,128], index: 0, kind: input, shape index: {}]
  %s1 = inlined_call_operand.hbm [shape: f32[8,128], index: 1, kind: output, shape index: {}]
  %s2 = sld [smem:[#allocation0]]
  $region18: #{tpu_custom_call.1} parent=0
    _
  %s4 = ssub.s32 1, %s2
  %s5 = scalar_select 0, %s4, %s2
  $region1: #{tpu_custom_call.1} parent=0
    #allocation2 [shape = 'u8[4096]{0}', space=vmem, size = 0x1000, scoped, tag = 'input window, operand 0, single buffered']
    #allocation3 [shape = 's32[1]{0}', space=sflag, size = 0x4, scoped, tag = 'scoped memory for tpu_custom_call.1']
    #allocation4 [shape = 's32[1]{0}', space=sflag, size = 0x4, scoped, tag = 'scoped memory for tpu_custom_call.1']
    #allocation5 [shape = 'u8[4096]{0}', space=vmem, size = 0x1000, scoped, tag = 'output window, operand 0, single buffered']
    %6 = vsyncpa [#allocation3], 0
    %7 = vsyncpa [#allocation4], 0
    // Predicated region
    $region2: #{tpu_custom_call.1} parent=1 // pred_check
      _
    $region3: #{tpu_custom_call.1} parent=1 // pred_check_branch
      %9 = sbr.rel (0) target = $region5
    $region4: #{tpu_custom_call.1} parent=1 // pred_region
      %s11 = ssub.s32 128, 128
      %12 = vsyncadd [#allocation3], %s11
      %s14 = sshll.u32 [#allocation2], 4
      %s15 = int_to_ptr.vmem [resolvable:$true] %s14
      %17 = dma.hbm_to_vmem [thread:$0]  %s0, 128, %s15, [#allocation3]
    $region5: #{tpu_custom_call.1} parent=1 // pred_fallthru
      _
    // Predicated region
    $region6: #{tpu_custom_call.1} parent=1 // pred_check
      _
    $region7: #{tpu_custom_call.1} parent=1 // pred_check_branch
      %19 = sbr.rel (0) target = $region9
    $region8: #{tpu_custom_call.1} parent=1 // pred_region
      %20 = dma.done [#allocation3], 128
    $region9: #{tpu_custom_call.1} parent=1 // pred_fallthru
      _
    %v21 = vld [vmem:[#allocation2] sm:$0xff]
    %22 = vrot.lane.b32.xlu0 %v21, 1
    %v23 = vpop.permute.xlu0 %22
    %24 = vst [vmem:[#allocation5] sm:$0xff] %v23
    // Predicated region
    $region10: #{tpu_custom_call.1} parent=1 // pred_check
      _
    $region11: #{tpu_custom_call.1} parent=1 // pred_check_branch
      %26 = sbr.rel (0) target = $region13
    $region12: #{tpu_custom_call.1} parent=1 // pred_region
      %s28 = ssub.s32 128, 128
      %29 = vsyncadd [#allocation4], %s28
      %s31 = sshll.u32 [#allocation5], 4
      %s32 = int_to_ptr.vmem [resolvable:$true] %s31
      %34 = dma.vmem_to_hbm [thread:$0]  %s32, 128, %s1, [#allocation4]
    $region13: #{tpu_custom_call.1} parent=1 // pred_fallthru
      _
    // Predicated region
    $region14: #{tpu_custom_call.1} parent=1 // pred_check
      _
    $region15: #{tpu_custom_call.1} parent=1 // pred_check_branch
      %36 = sbr.rel (0) target = $region17
    $region16: #{tpu_custom_call.1} parent=1 // pred_region
      %37 = dma.done [#allocation4], 128
    $region17: #{tpu_custom_call.1} parent=1 // pred_fallthru
      _
    %38 = vsyncpa [#allocation3], 1
    %39 = vsyncpa [#allocation4], 1

</llo_original>
